<compile_context>
chip_gen: v5e
topology: v5e:2x2
jax: 0.10.0
libtpu: 0.0.40
codegen_flags: <defaults>
</compile_context>

<pallas_src>
import functools

import numpy as np
import jax
import jax.numpy as jnp
from jax.experimental import pallas as pl
from jax.experimental.pallas import tpu as pltpu


def _round_up(x: int, m: int) -> int:
    return ((x + m - 1) // m) * m


@functools.lru_cache(maxsize=None)
def _hermite_projection(seq_len: int, degree: int, n_pad: int) -> np.ndarray:
    """pinv of the physicists' Hermite Vandermonde on linspace(-1,1,S).

    Returned as [S, n_pad] float32, zero-padded in columns >= degree+1, so
    `x @ proj` gives the fit coefficients in the first degree+1 lanes and
    exact zeros elsewhere.  Cached per (S, degree): no on-device SVD per call.
    """
    x = np.linspace(-1.0, 1.0, seq_len, dtype=np.float64)
    cols = [np.ones_like(x), 2.0 * x]
    for k in range(1, degree):
        cols.append(2.0 * x * cols[k] - 2.0 * k * cols[k - 1])
    A = np.stack(cols[: degree + 1], axis=1)          # [S, degree+1]
    proj = np.linalg.pinv(A).T                         # [S, degree+1]
    out = np.zeros((seq_len, n_pad), dtype=np.float32)
    out[:, : degree + 1] = proj.astype(np.float32)
    return out


def _vmem_capacity_bytes() -> int:
    try:
        return int(pltpu.get_tpu_info().vmem_capacity_bytes)
    except Exception:
        return 64 * 1024 * 1024   # conservative default (v7x per-core VMEM)


def _vmem_plan(batch, seq, in_itemsize, dot_itemsize, n_pad, budget, tb=None):
    """Pick the batch tile and return (tb, estimated VMEM footprint in bytes)."""
    align = max(8, 32 // max(in_itemsize, 1))     # 8 f32, 16 bf16, 32 i8 sublanes
    # tb-independent VMEM: proj (budget x2 in case single-buffering is
    # unavailable) + 2 output buffers.
    fixed = 2 * seq * n_pad * dot_itemsize + 2 * 8 * n_pad * 4
    # per-batch-row VMEM: pred+targ x 2 pipeline buffers, f32 diff
    # intermediate, low-precision dot LHS copy, c / |c| intermediates.
    per_row = (4 * seq * in_itemsize
               + 4 * seq
               + (seq * dot_itemsize if dot_itemsize < 4 else 0)
               + 2 * n_pad * 4)
    if tb is None:
        tb = max(0, budget - fixed) // per_row
        tb = max(align, min(4096, (tb // align) * align))
        tb = min(tb, _round_up(batch, align))
        if batch >= 2 * align:
            # Guarantee >= 2 tiles so the parallel grid axis can shard across
            # both TensorCores on v7x (a ~0.35us no-op on single-TC chips).
            tb = min(tb, _round_up(pl.cdiv(batch, 2), align))
    assert tb % 8 == 0, "batch tile must be a multiple of 8 sublanes"
    return tb, fixed + tb * per_row


def _hermite_partial_kernel(pred_ref, targ_ref, proj_ref, out_ref, *,
                            tb, n_pad, batch, dot_dtype):
    """One batch tile -> lane-dense (8, n_pad) partial abs-coefficient sums."""
    # Upcast + subtract in f32 in-register (v5e VPU has no bf16), then feed the
    # MXU in dot_dtype (bf16 for low-precision inputs) with f32 accumulation.
    diff = pred_ref[...].astype(jnp.float32) - targ_ref[...].astype(jnp.float32)
    c = jnp.dot(diff.astype(dot_dtype), proj_ref[...],
                preferred_element_type=jnp.float32)            # (tb, n_pad)
    absc = jnp.abs(c)
    if batch % tb != 0:
        # In-kernel tail masking: rows past the true batch hold unspecified
        # data (no wrapper-side jnp.pad copy), zero their |coef| rows.
        row = jax.lax.broadcasted_iota(jnp.int32, (tb, 1), 0) + pl.program_id(0) * tb
        absc = jnp.where(row < batch, absc, 0.0)
    # Fold tb rows onto 8 sublanes (sublane-tile aligned split, cheap VPU adds).
    out_ref[...] = jnp.sum(absc.reshape(tb // 8, 8, n_pad), axis=0)


def hermite_loss(predictions, targets, *, degree: int = 5, tb: int | None = None):
    assert predictions.shape == targets.shape
    S = predictions.shape[-1]
    predictions = predictions.reshape(-1, S)
    targets = targets.reshape(-1, S)
    B = predictions.shape[0]
    n_coef = degree + 1
    n_pad = _round_up(n_coef, 128)

    in_dtype = jnp.dtype(predictions.dtype)
    # Low-precision inputs -> bf16 MXU operands (avoids v5e's emulated f32
    # matmul, halves dot-LHS VMEM). f32 inputs keep the f32 path (still
    # HBM-bound on all generations for this 2*n_pad flops/elem kernel).
    dot_dtype = jnp.bfloat16 if in_dtype.itemsize < 4 else jnp.float32
    dot_itemsize = jnp.dtype(dot_dtype).itemsize

    capacity = _vmem_capacity_bytes()
    budget = int(capacity * 0.55)          # tile-sizing budget; leaves pipeline slack
    tb, footprint = _vmem_plan(B, S, in_dtype.itemsize, dot_itemsize, n_pad,
                               budget, tb=tb)
    num_tiles = pl.cdiv(B, tb)

    vmem_limit = int(min(0.9 * capacity,
                         max(32 * 1024 * 1024, footprint + 8 * 1024 * 1024)))

    proj = jnp.asarray(_hermite_projection(S, degree, n_pad), dtype=dot_dtype)

    cost = pl.CostEstimate(
        flops=2 * num_tiles * tb * S * n_pad,
        transcendentals=0,
        bytes_accessed=(2 * B * S * in_dtype.itemsize
                        + S * n_pad * dot_itemsize
                        + num_tiles * 8 * n_pad * 4),
    )

    kernel = functools.partial(_hermite_partial_kernel, tb=tb, n_pad=n_pad,
                               batch=B, dot_dtype=dot_dtype)

    def run(single_buffer_proj: bool):
        if single_buffer_proj:
            # proj's block index never changes -> single buffer saves VMEM.
            proj_spec = pl.BlockSpec((S, n_pad), lambda i: (0, 0),
                                     pipeline_mode=pl.Buffered(1))
        else:
            proj_spec = pl.BlockSpec((S, n_pad), lambda i: (0, 0))
        return pl.pallas_call(
            kernel,
            out_shape=jax.ShapeDtypeStruct((num_tiles * 8, n_pad), jnp.float32),
            grid_spec=pl.GridSpec(
                grid=(num_tiles,),
                in_specs=[
                    pl.BlockSpec((tb, S), lambda i: (i, 0)),   # predictions tile
                    pl.BlockSpec((tb, S), lambda i: (i, 0)),   # targets tile
                    proj_spec,                                  # projection, resident
                ],
                out_specs=pl.BlockSpec((8, n_pad), lambda i: (i, 0)),
            ),
            compiler_params=pltpu.CompilerParams(
                dimension_semantics=("parallel",),   # independent tiles -> megacore
                vmem_limit_bytes=vmem_limit),
            cost_estimate=cost,
        )(predictions, targets, proj)

    try:
        partials = run(single_buffer_proj=True)
    except Exception:
        # Fallback for environments without BlockSpec pipeline_mode support;
        # identical math, default double-buffered proj.
        partials = run(single_buffer_proj=False)

    # Tiny final reduction + mean scale in plain JAX (masked rows / padded
    # coefficient lanes are exactly zero).
    return jnp.sum(partials) * (1.0 / (B * n_coef))


def hermite_loss_ref(predictions, targets, *, degree: int = 5):
    """Plain-JAX reference (same math, no Pallas)."""
    S = predictions.shape[-1]
    n_pad = _round_up(degree + 1, 128)
    proj = jnp.asarray(_hermite_projection(S, degree, n_pad))[:, : degree + 1]
    p = predictions.reshape(-1, S).astype(jnp.float32)
    t = targets.reshape(-1, S).astype(jnp.float32)
    return jnp.mean(jnp.abs(p @ proj - t @ proj))


if __name__ == "__main__":
    key = jax.random.PRNGKey(0)
    k1, k2, k3, k4 = jax.random.split(key, 4)
    DEGREE = 5

    # 1) Tile-aligned batch, f32: batch=8, seq=128.
    p1 = jax.random.normal(k1, (8, 128), dtype=jnp.float32)
    t1 = jax.random.normal(k2, (8, 128), dtype=jnp.float32)
    out1 = jax.block_until_ready(hermite_loss(p1, t1, degree=DEGREE))
    ref1 = jax.block_until_ready(hermite_loss_ref(p1, t1, degree=DEGREE))
    assert jnp.allclose(out1, ref1, rtol=1e-4, atol=1e-5), (out1, ref1)

    # 2) Ragged batch, f32 (exercises in-kernel tail masking, no pad copy).
    p2 = jax.random.normal(k3, (13, 128), dtype=jnp.float32)
    t2 = jax.random.normal(k4, (13, 128), dtype=jnp.float32)
    out2 = jax.block_until_ready(hermite_loss(p2, t2, degree=DEGREE))
    ref2 = jax.block_until_ready(hermite_loss_ref(p2, t2, degree=DEGREE))
    assert jnp.allclose(out2, ref2, rtol=1e-4, atol=1e-5), (out2, ref2)

    # 3) bf16 inputs (exercises the bf16 MXU path; looser tolerance).
    p3, t3 = p2.astype(jnp.bfloat16), t2.astype(jnp.bfloat16)
    out3 = jax.block_until_ready(hermite_loss(p3, t3, degree=DEGREE))
    ref3 = jax.block_until_ready(hermite_loss_ref(p3, t3, degree=DEGREE))
    assert jnp.allclose(out3, ref3, rtol=1e-1, atol=1e-3), (out3, ref3)

    print("KERNEL_OK")
</pallas_src>

<mosaic_0001>
module attributes {stable_mosaic.version = 11 : i64} {
  func.func @_hermite_partial_kernel(%arg0: i32, %arg1: memref<8x128xf32, #tpu.memory_space<vmem>>, %arg2: memref<8x128xf32, #tpu.memory_space<vmem>>, %arg3: memref<128x128xf32, #tpu.memory_space<vmem>>, %arg4: memref<8x128xf32, #tpu.memory_space<vmem>>) attributes {dimension_semantics = [#tpu.dimension_semantics<parallel>], iteration_bounds = array<i64: 1>, scalar_prefetch = 0 : i64, scratch_operands = 0 : i64, tpu.core_type = #tpu.core_type<tc>, window_params = [{transform_indices = @transform_0, window_bounds = array<i64: 8, 128>}, {transform_indices = @transform_1, window_bounds = array<i64: 8, 128>}, {pipeline_mode = #tpu.pipeline_mode<synchronous>, transform_indices = @transform_2, window_bounds = array<i64: 128, 128>}, {transform_indices = @transform_3, window_bounds = array<i64: 8, 128>}]} {
    %c0 = arith.constant 0 : index
    %c0_0 = arith.constant 0 : index
    %0 = vector.load %arg1[%c0, %c0_0] : memref<8x128xf32, #tpu.memory_space<vmem>>, vector<8x128xf32>
    %c0_1 = arith.constant 0 : index
    %c0_2 = arith.constant 0 : index
    %1 = vector.load %arg2[%c0_1, %c0_2] : memref<8x128xf32, #tpu.memory_space<vmem>>, vector<8x128xf32>
    %2 = arith.subf %0, %1 : vector<8x128xf32>
    %c0_3 = arith.constant 0 : index
    %c0_4 = arith.constant 0 : index
    %3 = vector.load %arg3[%c0_3, %c0_4] : memref<128x128xf32, #tpu.memory_space<vmem>>, vector<128x128xf32>
    %cst = arith.constant dense<0.000000e+00> : vector<8x128xf32>
    %4 = tpu.matmul %2, %3, %cst {dimension_numbers = #tpu.dot_dimension_numbers<[1], [0], [0], [1], [0, 0, 1, 1], [], []>} : vector<8x128xf32>, vector<128x128xf32>, vector<8x128xf32> -> vector<8x128xf32>
    %5 = math.absf %4 : vector<8x128xf32>
    %6 = vector.shape_cast %5 : vector<8x128xf32> to vector<1x8x128xf32>
    %cst_5 = arith.constant dense<0.000000e+00> : vector<8x128xf32>
    %7 = vector.multi_reduction <add>, %6, %cst_5 [0] : vector<1x8x128xf32> to vector<8x128xf32>
    %c0_6 = arith.constant 0 : index
    %c0_7 = arith.constant 0 : index
    %8 = vector.load %arg4[%c0_6, %c0_7] : memref<8x128xf32, #tpu.memory_space<vmem>>, vector<8x128xf32>
    tpu.vector_store %arg4[%c0_6, %c0_7], %7 {strides = array<i32>} : memref<8x128xf32, #tpu.memory_space<vmem>>, vector<8x128xf32>,
    return
  }
  func.func @transform_0(%arg0: i32) -> (i32, i32) {
    %c0_i32 = arith.constant 0 : i32
    %c0_i32_0 = arith.constant 0 : i32
    return %arg0, %c0_i32 : i32, i32
  }
  func.func @transform_1(%arg0: i32) -> (i32, i32) {
    %c0_i32 = arith.constant 0 : i32
    %c0_i32_0 = arith.constant 0 : i32
    return %arg0, %c0_i32 : i32, i32
  }
  func.func @transform_2(%arg0: i32) -> (i32, i32) {
    %c0_i32 = arith.constant 0 : i32
    %c0_i32_0 = arith.constant 0 : i32
    %c0_i32_1 = arith.constant 0 : i32
    return %c0_i32, %c0_i32_0 : i32, i32
  }
  func.func @transform_3(%arg0: i32) -> (i32, i32) {
    %c0_i32 = arith.constant 0 : i32
    %c0_i32_0 = arith.constant 0 : i32
    return %arg0, %c0_i32 : i32, i32
  }
}

module attributes {stable_mosaic.version = 11 : i64} {
  func.func @_hermite_partial_kernel(%arg0: i32, %arg1: memref<8x128xf32, #tpu.memory_space<vmem>>, %arg2: memref<8x128xf32, #tpu.memory_space<vmem>>, %arg3: memref<128x128xf32, #tpu.memory_space<vmem>>, %arg4: memref<8x128xf32, #tpu.memory_space<vmem>>) attributes {dimension_semantics = [#tpu.dimension_semantics<parallel>], iteration_bounds = array<i64: 1>, scalar_prefetch = 0 : i64, scratch_operands = 0 : i64, tpu.core_type = #tpu.core_type<tc>, window_params = [{transform_indices = @transform_0, window_bounds = array<i64: 8, 128>}, {transform_indices = @transform_1, window_bounds = array<i64: 8, 128>}, {pipeline_mode = #tpu.pipeline_mode<synchronous>, transform_indices = @transform_2, window_bounds = array<i64: 128, 128>}, {transform_indices = @transform_3, window_bounds = array<i64: 8, 128>}]} {
    %c0 = arith.constant 0 : index
    %c0_0 = arith.constant 0 : index
    %0 = vector.load %arg1[%c0, %c0_0] : memref<8x128xf32, #tpu.memory_space<vmem>>, vector<8x128xf32>
    %c0_1 = arith.constant 0 : index
    %c0_2 = arith.constant 0 : index
    %1 = vector.load %arg2[%c0_1, %c0_2] : memref<8x128xf32, #tpu.memory_space<vmem>>, vector<8x128xf32>
    %2 = arith.subf %0, %1 : vector<8x128xf32>
    %c0_3 = arith.constant 0 : index
    %c0_4 = arith.constant 0 : index
    %3 = vector.load %arg3[%c0_3, %c0_4] : memref<128x128xf32, #tpu.memory_space<vmem>>, vector<128x128xf32>
    %cst = arith.constant dense<0.000000e+00> : vector<8x128xf32>
    %4 = tpu.matmul %2, %3, %cst {dimension_numbers = #tpu.dot_dimension_numbers<[1], [0], [0], [1], [0, 0, 1, 1], [], []>} : vector<8x128xf32>, vector<128x128xf32>, vector<8x128xf32> -> vector<8x128xf32>
    %5 = math.absf %4 : vector<8x128xf32>
    %6 = vector.shape_cast %5 : vector<8x128xf32> to vector<1x8x128xf32>
    %cst_5 = arith.constant dense<0.000000e+00> : vector<8x128xf32>
    %7 = vector.multi_reduction <add>, %6, %cst_5 [0] : vector<1x8x128xf32> to vector<8x128xf32>
    %c0_6 = arith.constant 0 : index
    %c0_7 = arith.constant 0 : index
    %8 = vector.load %arg4[%c0_6, %c0_7] : memref<8x128xf32, #tpu.memory_space<vmem>>, vector<8x128xf32>
    tpu.vector_store %arg4[%c0_6, %c0_7], %7 {strides = array<i32>} : memref<8x128xf32, #tpu.memory_space<vmem>>, vector<8x128xf32>,
    return
  }
  func.func @transform_0(%arg0: i32) -> (i32, i32) {
    %c0_i32 = arith.constant 0 : i32
    %c0_i32_0 = arith.constant 0 : i32
    return %arg0, %c0_i32 : i32, i32
  }
  func.func @transform_1(%arg0: i32) -> (i32, i32) {
    %c0_i32 = arith.constant 0 : i32
    %c0_i32_0 = arith.constant 0 : i32
    return %arg0, %c0_i32 : i32, i32
  }
  func.func @transform_2(%arg0: i32) -> (i32, i32) {
    %c0_i32 = arith.constant 0 : i32
    %c0_i32_0 = arith.constant 0 : i32
    %c0_i32_1 = arith.constant 0 : i32
    return %c0_i32, %c0_i32_0 : i32, i32
  }
  func.func @transform_3(%arg0: i32) -> (i32, i32) {
    %c0_i32 = arith.constant 0 : i32
    %c0_i32_0 = arith.constant 0 : i32
    return %arg0, %c0_i32 : i32, i32
  }
}

</mosaic_0001>

<llo_original>
// kernel: tpu_custom_call.1
$region0: #{tpu_custom_call.1}
  #allocation0 [shape = 'u32[]', space=smem, size = 0x4, offset = 0x4, fixed_abs, tag = 'smem constant byte address 0x4 - core index']
  #allocation1 [shape = 'u32[72,128]{1,0:T(1,128)}', space=vmem, size = 0x9000, scoped, tag = 'internal scratch']
  %s0 = inlined_call_operand.hbm [shape: f32[8,128], index: 0, kind: input, shape index: {}]
  %s1 = inlined_call_operand.hbm [shape: f32[8,128], index: 1, kind: input, shape index: {}]
  %s2 = inlined_call_operand.hbm [shape: f32[128,128], index: 2, kind: input, shape index: {}]
  %s3 = inlined_call_operand.hbm [shape: f32[8,128], index: 3, kind: output, shape index: {}]
  %s4 = sld [smem:[#allocation0]]
  $region34: #{tpu_custom_call.1} parent=0
    _
  %s6 = ssub.s32 1, %s4
  %s7 = scalar_select 0, %s6, %s4
  $region1: #{tpu_custom_call.1} parent=0
    #allocation2 [shape = 'u8[4096]{0}', space=vmem, size = 0x1000, scoped, tag = 'input window, operand 0, single buffered']
    #allocation3 [shape = 's32[1]{0}', space=sflag, size = 0x4, scoped, tag = 'scoped memory for tpu_custom_call.1']
    #allocation4 [shape = 's32[1]{0}', space=sflag, size = 0x4, scoped, tag = 'scoped memory for tpu_custom_call.1']
    #allocation5 [shape = 'u8[4096]{0}', space=vmem, size = 0x1000, scoped, tag = 'input window, operand 1, single buffered']
    #allocation6 [shape = 's32[1]{0}', space=sflag, size = 0x4, scoped, tag = 'scoped memory for tpu_custom_call.1']
    #allocation7 [shape = 'u8[65536]{0}', space=vmem, size = 0x10000, scoped, tag = 'input window, operand 2, single buffered']
    #allocation8 [shape = 'u8[4096]{0}', space=vmem, size = 0x1000, scoped, tag = 'output window, operand 0, single buffered']
    %8 = vsyncpa [#allocation3], 0
    %9 = vsyncpa [#allocation6], 0
    %10 = vsyncpa [#allocation4], 0
    // Predicated region
    $region2: #{tpu_custom_call.1} parent=1 // pred_check
      _
    $region3: #{tpu_custom_call.1} parent=1 // pred_check_branch
      %12 = sbr.rel (0) target = $region5
    $region4: #{tpu_custom_call.1} parent=1 // pred_region
      %14 = vsyncadd [#allocation3], 0
      %s16 = sshll.u32 %s0, 4
      %s17 = int_to_ptr.hbm [resolvable:$true] %s16
      %s18 = sshll.u32 [#allocation2], 4
      %s19 = int_to_ptr.vmem [resolvable:$true] %s18
      %21 = dma.hbm_to_vmem [thread:$0]  %s17, 128, %s19, [#allocation3]
    $region5: #{tpu_custom_call.1} parent=1 // pred_fallthru
      _
    // Predicated region
    $region6: #{tpu_custom_call.1} parent=1 // pred_check
      _
    $region7: #{tpu_custom_call.1} parent=1 // pred_check_branch
      %23 = sbr.rel (0) target = $region9
    $region8: #{tpu_custom_call.1} parent=1 // pred_region
      %25 = vsyncadd [#allocation6], 0
      %s27 = sshll.u32 %s1, 4
      %s28 = int_to_ptr.hbm [resolvable:$true] %s27
      %s29 = sshll.u32 [#allocation5], 4
      %s30 = int_to_ptr.vmem [resolvable:$true] %s29
      %32 = dma.hbm_to_vmem [thread:$0]  %s28, 128, %s30, [#allocation6]
    $region9: #{tpu_custom_call.1} parent=1 // pred_fallthru
      _
    // Predicated region
    $region10: #{tpu_custom_call.1} parent=1 // pred_check
      _
    $region11: #{tpu_custom_call.1} parent=1 // pred_check_branch
      %34 = sbr.rel (0) target = $region13
    $region12: #{tpu_custom_call.1} parent=1 // pred_region
      %36 = vsyncadd [#allocation6], 0
      %s37 = sshll.u32 %s2, 4
      %s38 = int_to_ptr.hbm [resolvable:$true] %s37
      %s39 = sshll.u32 [#allocation7], 4
      %s40 = int_to_ptr.vmem [resolvable:$true] %s39
      %45 = dma.hbm_to_vmem [thread:$0]  %s38, 2048, %s40, [#allocation6], 128, 128, 8
    $region13: #{tpu_custom_call.1} parent=1 // pred_fallthru
      _
    // Predicated region
    $region14: #{tpu_custom_call.1} parent=1 // pred_check
      _
    $region15: #{tpu_custom_call.1} parent=1 // pred_check_branch
      %47 = sbr.rel (0) target = $region17
    $region16: #{tpu_custom_call.1} parent=1 // pred_region
      %49 = dma.done [#allocation3], 128
    $region17: #{tpu_custom_call.1} parent=1 // pred_fallthru
      _
    // Predicated region
    $region18: #{tpu_custom_call.1} parent=1 // pred_check
      _
    $region19: #{tpu_custom_call.1} parent=1 // pred_check_branch
      %51 = sbr.rel (0) target = $region21
    $region20: #{tpu_custom_call.1} parent=1 // pred_region
      %53 = dma.done [#allocation6], 128
    $region21: #{tpu_custom_call.1} parent=1 // pred_fallthru
      _
    // Predicated region
    $region22: #{tpu_custom_call.1} parent=1 // pred_check
      _
    $region23: #{tpu_custom_call.1} parent=1 // pred_check_branch
      %55 = sbr.rel (0) target = $region25
    $region24: #{tpu_custom_call.1} parent=1 // pred_region
      %57 = dma.done [#allocation6], 2048
    $region25: #{tpu_custom_call.1} parent=1 // pred_fallthru
      _
    %v58 = vld [vmem:[#allocation2] sm:$0xff]
    %v59 = vld [vmem:[#allocation5] sm:$0xff]
    %v60 = vsub.f32 %v58, %v59
    %v61 = vld [vmem:[#allocation7] sm:$0xff]
    %v62 = vld [vmem:[#allocation7 + $0x8] sm:$0xff]
    %v63 = vld [vmem:[#allocation7 + $0x10] sm:$0xff]
    %v64 = vld [vmem:[#allocation7 + $0x18] sm:$0xff]
    %v65 = vld [vmem:[#allocation7 + $0x20] sm:$0xff]
    %v66 = vld [vmem:[#allocation7 + $0x28] sm:$0xff]
    %v67 = vld [vmem:[#allocation7 + $0x30] sm:$0xff]
    %v68 = vld [vmem:[#allocation7 + $0x38] sm:$0xff]
    %v69 = vld [vmem:[#allocation7 + $0x40] sm:$0xff]
    %v70 = vld [vmem:[#allocation7 + $0x48] sm:$0xff]
    %v71 = vld [vmem:[#allocation7 + $0x50] sm:$0xff]
    %v72 = vld [vmem:[#allocation7 + $0x58] sm:$0xff]
    %v73 = vld [vmem:[#allocation7 + $0x60] sm:$0xff]
    %v74 = vld [vmem:[#allocation7 + $0x68] sm:$0xff]
    %v75 = vld [vmem:[#allocation7 + $0x70] sm:$0xff]
    %v76 = vld [vmem:[#allocation7 + $0x78] sm:$0xff]
    %77 = vmatpush.msra.mxu0 %v76
    %78 = vmatpush.msra.mxu0 %v75
    %79 = vmatpush.msra.mxu0 %v74
    %80 = vmatpush.msra.mxu0 %v73
    %81 = vmatpush.msra.mxu0 %v72
    %82 = vmatpush.msra.mxu0 %v71
    %83 = vmatpush.msra.mxu0 %v70
    %84 = vmatpush.msra.mxu0 %v69
    %85 = vmatpush.msra.mxu0 %v68
    %86 = vmatpush.msra.mxu0 %v67
    %87 = vmatpush.msra.mxu0 %v66
    %88 = vmatpush.msra.mxu0 %v65
    %89 = vmatpush.msra.mxu0 %v64
    %90 = vmatpush.msra.mxu0 %v63
    %91 = vmatpush.msra.mxu0 %v62
    %92 = vmatpush.msra.mxu0 %v61
    %93 = vmatmul.f32.gmra.mxu0 %v60
    %v94 = vpop.f32.mrf.mxu0
    %v95 = vadd.f32 0.0, %v94
    %96 = vdwg.mxu0
    %v97 = vand.u32 2147483647, %v95
    %v98 = vadd.f32 %v97, 0.0
    %99 = vst [vmem:[#allocation8] sm:$0xff] %v98
    // Predicated region
    $region26: #{tpu_custom_call.1} parent=1 // pred_check
      _
    $region27: #{tpu_custom_call.1} parent=1 // pred_check_branch
      %101 = sbr.rel (0) target = $region29
    $region28: #{tpu_custom_call.1} parent=1 // pred_region
      %103 = vsyncadd [#allocation4], 0
      %s105 = sshll.u32 [#allocation8], 4
      %s106 = int_to_ptr.vmem [resolvable:$true] %s105
      %s107 = sshll.u32 %s3, 4
      %s108 = int_to_ptr.hbm [resolvable:$true] %s107
      %110 = dma.vmem_to_hbm [thread:$0]  %s106, 128, %s108, [#allocation4]
    $region29: #{tpu_custom_call.1} parent=1 // pred_fallthru
      _
    // Predicated region
    $region30: #{tpu_custom_call.1} parent=1 // pred_check
      _
    $region31: #{tpu_custom_call.1} parent=1 // pred_check_branch
      %112 = sbr.rel (0) target = $region33
    $region32: #{tpu_custom_call.1} parent=1 // pred_region
      %114 = dma.done [#allocation4], 128
    $region33: #{tpu_custom_call.1} parent=1 // pred_fallthru
      _
    %115 = vsyncpa [#allocation3], 1
    %116 = vsyncpa [#allocation6], 1
    %117 = vsyncpa [#allocation4], 1

// kernel: tpu_custom_call.1
$region0: #{tpu_custom_call.1}
  #allocation0 [shape = 'u32[]', space=smem, size = 0x4, offset = 0x4, fixed_abs, tag = 'smem constant byte address 0x4 - core index']
  #allocation1 [shape = 'u32[72,128]{1,0:T(1,128)}', space=vmem, size = 0x9000, scoped, tag = 'internal scratch']
  %s0 = inlined_call_operand.hbm [shape: f32[8,128], index: 0, kind: input, shape index: {}]
  %s1 = inlined_call_operand.hbm [shape: f32[8,128], index: 1, kind: input, shape index: {}]
  %s2 = inlined_call_operand.hbm [shape: f32[128,128], index: 2, kind: input, shape index: {}]
  %s3 = inlined_call_operand.hbm [shape: f32[8,128], index: 3, kind: output, shape index: {}]
  %s4 = sld [smem:[#allocation0]]
  $region34: #{tpu_custom_call.1} parent=0
    _
  %s6 = ssub.s32 1, %s4
  %s7 = scalar_select 0, %s6, %s4
  $region1: #{tpu_custom_call.1} parent=0
    #allocation2 [shape = 'u8[4096]{0}', space=vmem, size = 0x1000, scoped, tag = 'input window, operand 0, single buffered']
    #allocation3 [shape = 's32[1]{0}', space=sflag, size = 0x4, scoped, tag = 'scoped memory for tpu_custom_call.1']
    #allocation4 [shape = 's32[1]{0}', space=sflag, size = 0x4, scoped, tag = 'scoped memory for tpu_custom_call.1']
    #allocation5 [shape = 'u8[4096]{0}', space=vmem, size = 0x1000, scoped, tag = 'input window, operand 1, single buffered']
    #allocation6 [shape = 's32[1]{0}', space=sflag, size = 0x4, scoped, tag = 'scoped memory for tpu_custom_call.1']
    #allocation7 [shape = 'u8[65536]{0}', space=vmem, size = 0x10000, scoped, tag = 'input window, operand 2, single buffered']
    #allocation8 [shape = 'u8[4096]{0}', space=vmem, size = 0x1000, scoped, tag = 'output window, operand 0, single buffered']
    %8 = vsyncpa [#allocation3], 0
    %9 = vsyncpa [#allocation6], 0
    %10 = vsyncpa [#allocation4], 0
    // Predicated region
    $region2: #{tpu_custom_call.1} parent=1 // pred_check
      _
    $region3: #{tpu_custom_call.1} parent=1 // pred_check_branch
      %12 = sbr.rel (0) target = $region5
    $region4: #{tpu_custom_call.1} parent=1 // pred_region
      %14 = vsyncadd [#allocation3], 0
      %s16 = sshll.u32 %s0, 4
      %s17 = int_to_ptr.hbm [resolvable:$true] %s16
      %s18 = sshll.u32 [#allocation2], 4
      %s19 = int_to_ptr.vmem [resolvable:$true] %s18
      %21 = dma.hbm_to_vmem [thread:$0]  %s17, 128, %s19, [#allocation3]
    $region5: #{tpu_custom_call.1} parent=1 // pred_fallthru
      _
    // Predicated region
    $region6: #{tpu_custom_call.1} parent=1 // pred_check
      _
    $region7: #{tpu_custom_call.1} parent=1 // pred_check_branch
      %23 = sbr.rel (0) target = $region9
    $region8: #{tpu_custom_call.1} parent=1 // pred_region
      %25 = vsyncadd [#allocation6], 0
      %s27 = sshll.u32 %s1, 4
      %s28 = int_to_ptr.hbm [resolvable:$true] %s27
      %s29 = sshll.u32 [#allocation5], 4
      %s30 = int_to_ptr.vmem [resolvable:$true] %s29
      %32 = dma.hbm_to_vmem [thread:$0]  %s28, 128, %s30, [#allocation6]
    $region9: #{tpu_custom_call.1} parent=1 // pred_fallthru
      _
    // Predicated region
    $region10: #{tpu_custom_call.1} parent=1 // pred_check
      _
    $region11: #{tpu_custom_call.1} parent=1 // pred_check_branch
      %34 = sbr.rel (0) target = $region13
    $region12: #{tpu_custom_call.1} parent=1 // pred_region
      %36 = vsyncadd [#allocation6], 0
      %s37 = sshll.u32 %s2, 4
      %s38 = int_to_ptr.hbm [resolvable:$true] %s37
      %s39 = sshll.u32 [#allocation7], 4
      %s40 = int_to_ptr.vmem [resolvable:$true] %s39
      %45 = dma.hbm_to_vmem [thread:$0]  %s38, 2048, %s40, [#allocation6], 128, 128, 8
    $region13: #{tpu_custom_call.1} parent=1 // pred_fallthru
      _
    // Predicated region
    $region14: #{tpu_custom_call.1} parent=1 // pred_check
      _
    $region15: #{tpu_custom_call.1} parent=1 // pred_check_branch
      %47 = sbr.rel (0) target = $region17
    $region16: #{tpu_custom_call.1} parent=1 // pred_region
      %49 = dma.done [#allocation3], 128
    $region17: #{tpu_custom_call.1} parent=1 // pred_fallthru
      _
    // Predicated region
    $region18: #{tpu_custom_call.1} parent=1 // pred_check
      _
    $region19: #{tpu_custom_call.1} parent=1 // pred_check_branch
      %51 = sbr.rel (0) target = $region21
    $region20: #{tpu_custom_call.1} parent=1 // pred_region
      %53 = dma.done [#allocation6], 128
    $region21: #{tpu_custom_call.1} parent=1 // pred_fallthru
      _
    // Predicated region
    $region22: #{tpu_custom_call.1} parent=1 // pred_check
      _
    $region23: #{tpu_custom_call.1} parent=1 // pred_check_branch
      %55 = sbr.rel (0) target = $region25
    $region24: #{tpu_custom_call.1} parent=1 // pred_region
      %57 = dma.done [#allocation6], 2048
    $region25: #{tpu_custom_call.1} parent=1 // pred_fallthru
      _
    %v58 = vld [vmem:[#allocation2] sm:$0xff]
    %v59 = vld [vmem:[#allocation5] sm:$0xff]
    %v60 = vsub.f32 %v58, %v59
    %v61 = vld [vmem:[#allocation7] sm:$0xff]
    %v62 = vld [vmem:[#allocation7 + $0x8] sm:$0xff]
    %v63 = vld [vmem:[#allocation7 + $0x10] sm:$0xff]
    %v64 = vld [vmem:[#allocation7 + $0x18] sm:$0xff]
    %v65 = vld [vmem:[#allocation7 + $0x20] sm:$0xff]
    %v66 = vld [vmem:[#allocation7 + $0x28] sm:$0xff]
    %v67 = vld [vmem:[#allocation7 + $0x30] sm:$0xff]
    %v68 = vld [vmem:[#allocation7 + $0x38] sm:$0xff]
    %v69 = vld [vmem:[#allocation7 + $0x40] sm:$0xff]
    %v70 = vld [vmem:[#allocation7 + $0x48] sm:$0xff]
    %v71 = vld [vmem:[#allocation7 + $0x50] sm:$0xff]
    %v72 = vld [vmem:[#allocation7 + $0x58] sm:$0xff]
    %v73 = vld [vmem:[#allocation7 + $0x60] sm:$0xff]
    %v74 = vld [vmem:[#allocation7 + $0x68] sm:$0xff]
    %v75 = vld [vmem:[#allocation7 + $0x70] sm:$0xff]
    %v76 = vld [vmem:[#allocation7 + $0x78] sm:$0xff]
    %77 = vmatpush.msra.mxu0 %v76
    %78 = vmatpush.msra.mxu0 %v75
    %79 = vmatpush.msra.mxu0 %v74
    %80 = vmatpush.msra.mxu0 %v73
    %81 = vmatpush.msra.mxu0 %v72
    %82 = vmatpush.msra.mxu0 %v71
    %83 = vmatpush.msra.mxu0 %v70
    %84 = vmatpush.msra.mxu0 %v69
    %85 = vmatpush.msra.mxu0 %v68
    %86 = vmatpush.msra.mxu0 %v67
    %87 = vmatpush.msra.mxu0 %v66
    %88 = vmatpush.msra.mxu0 %v65
    %89 = vmatpush.msra.mxu0 %v64
    %90 = vmatpush.msra.mxu0 %v63
    %91 = vmatpush.msra.mxu0 %v62
    %92 = vmatpush.msra.mxu0 %v61
    %93 = vmatmul.f32.gmra.mxu0 %v60
    %v94 = vpop.f32.mrf.mxu0
    %v95 = vadd.f32 0.0, %v94
    %96 = vdwg.mxu0
    %v97 = vand.u32 2147483647, %v95
    %v98 = vadd.f32 %v97, 0.0
    %99 = vst [vmem:[#allocation8] sm:$0xff] %v98
    // Predicated region
    $region26: #{tpu_custom_call.1} parent=1 // pred_check
      _
    $region27: #{tpu_custom_call.1} parent=1 // pred_check_branch
      %101 = sbr.rel (0) target = $region29
    $region28: #{tpu_custom_call.1} parent=1 // pred_region
      %103 = vsyncadd [#allocation4], 0
      %s105 = sshll.u32 [#allocation8], 4
      %s106 = int_to_ptr.vmem [resolvable:$true] %s105
      %s107 = sshll.u32 %s3, 4
      %s108 = int_to_ptr.hbm [resolvable:$true] %s107
      %110 = dma.vmem_to_hbm [thread:$0]  %s106, 128, %s108, [#allocation4]
    $region29: #{tpu_custom_call.1} parent=1 // pred_fallthru
      _
    // Predicated region
    $region30: #{tpu_custom_call.1} parent=1 // pred_check
      _
    $region31: #{tpu_custom_call.1} parent=1 // pred_check_branch
      %112 = sbr.rel (0) target = $region33
    $region32: #{tpu_custom_call.1} parent=1 // pred_region
      %114 = dma.done [#allocation4], 128
    $region33: #{tpu_custom_call.1} parent=1 // pred_fallthru
      _
    %115 = vsyncpa [#allocation3], 1
    %116 = vsyncpa [#allocation6], 1
    %117 = vsyncpa [#allocation4], 1

</llo_original>
